<compile_context>
chip_gen: v7x
topology: tpu7x:2x2x1
jax: 0.10.0
libtpu: 0.0.40
codegen_flags: <defaults>
</compile_context>

<pallas_src>
import functools

import jax
import jax.numpy as jnp
from jax.experimental import pallas as pl
from jax.experimental.pallas import tpu as pltpu

_IGNORE_INDEX = 255
_TARGET_BLOCK_BYTES = 2 * 1024 * 1024   # ~2 MiB logits block per pipeline buffer


def _ce2d_kernel(x_ref, t_ref, sum_ref, cnt_ref, *, hw, tile_hw):
    """One grid step: one image slab of TILE_HW pixels, all C channels.

    x_ref:   [1, C, TILE_HW]  logits (source dtype), channels on sublanes
    t_ref:   [1, 1, TILE_HW]  int32 targets, lane-dense
    sum_ref: [1, 1, 1, 1]     partial sum of per-pixel NLL for this step
    cnt_ref: [1, 1, 1, 1]     partial count of valid pixels for this step
    """
    j = pl.program_id(1)

    x = x_ref[0].astype(jnp.float32)        # [C, T]
    t = t_ref[0]                            # [1, T] int32

    valid = t != _IGNORE_INDEX              # [1, T]
    if hw % tile_hw != 0:
        # Ragged tail of the pixel axis: mask out-of-range lanes (their logits
        # / targets are unspecified partial-block data).
        pix = j * tile_hw + jax.lax.broadcasted_iota(jnp.int32, t.shape, 1)
        valid = valid & (pix < hw)

    # Numerically stable logsumexp over the channel (sublane) axis.
    m = jnp.max(x, axis=0, keepdims=True)                                 # [1, T]
    lse = m + jnp.log(jnp.sum(jnp.exp(x - m), axis=0, keepdims=True))     # [1, T]

    # Gather target-class logit via one-hot select (no dynamic gather on TPU).
    cls = jax.lax.broadcasted_iota(jnp.int32, x.shape, 0)                 # [C, T]
    x_t = jnp.sum(jnp.where(cls == t, x, 0.0), axis=0, keepdims=True)     # [1, T]

    per_pix = jnp.where(valid, lse - x_t, 0.0)                            # [1, T]

    sum_ref[...] = jnp.reshape(jnp.sum(per_pix), (1, 1, 1, 1))
    cnt_ref[...] = jnp.reshape(jnp.sum(valid.astype(jnp.float32)), (1, 1, 1, 1))


@jax.jit
def cross_entropy_loss_2d(inputs, targets):
    """inputs: [N, C, H, W] logits; targets: [N, H, W] int class indices."""
    N, C, H, W = inputs.shape
    HW = H * W

    # Free reshapes: collapse spatial dims only (no transpose, no pad).
    x = inputs.reshape(N, C, HW)
    t = targets.reshape(N, 1, HW).astype(jnp.int32)

    # Pick the pixel tile so one logits block is ~2 MiB (accounting for sublane
    # padding of C up to a multiple of 8).  Lane dim must be a multiple of 128.
    itemsize = jnp.dtype(inputs.dtype).itemsize
    c_pad = ((C + 7) // 8) * 8
    tile_hw = _TARGET_BLOCK_BYTES // (c_pad * itemsize)
    tile_hw = max(128, (tile_hw // 128) * 128)
    hw_up = ((HW + 127) // 128) * 128
    tile_hw = min(tile_hw, hw_up)
    n_tiles = pl.cdiv(HW, tile_hw)

    kernel = functools.partial(_ce2d_kernel, hw=HW, tile_hw=tile_hw)

    sums, cnts = pl.pallas_call(
        kernel,
        out_shape=(
            jax.ShapeDtypeStruct((N, n_tiles, 1, 1), jnp.float32),
            jax.ShapeDtypeStruct((N, n_tiles, 1, 1), jnp.float32),
        ),
        grid=(N, n_tiles),
        in_specs=[
            pl.BlockSpec((1, C, tile_hw), lambda n, j: (n, 0, j)),
            pl.BlockSpec((1, 1, tile_hw), lambda n, j: (n, 0, j)),
        ],
        out_specs=(
            pl.BlockSpec((1, 1, 1, 1), lambda n, j: (n, j, 0, 0)),
            pl.BlockSpec((1, 1, 1, 1), lambda n, j: (n, j, 0, 0)),
        ),
        compiler_params=pltpu.CompilerParams(
            dimension_semantics=("parallel", "parallel"),
            vmem_limit_bytes=32 * 1024 * 1024,
        ),
    )(x, t)

    # size_average=True, weight=None -> divide by number of valid pixels.
    # (All-ignored input -> 0/0 NaN, matching PyTorch behavior.)
    return jnp.sum(sums) / jnp.sum(cnts)


def _reference_loss(inputs, targets):
    """Pure-JAX reference of NLLLoss2d(log_softmax(inputs, dim=1), targets)."""
    logp = jax.nn.log_softmax(inputs.astype(jnp.float32), axis=1)  # [N,C,H,W]
    t = targets.astype(jnp.int32)
    valid = t != _IGNORE_INDEX
    t_safe = jnp.where(valid, t, 0)
    picked = jnp.take_along_axis(logp, t_safe[:, None, :, :], axis=1)[:, 0]
    nll = jnp.where(valid, -picked, 0.0)
    return jnp.sum(nll) / jnp.sum(valid.astype(jnp.float32))


if __name__ == "__main__":
    key = jax.random.PRNGKey(0)
    k_x, k_t, k_m = jax.random.split(key, 3)

    # Case 1: H*W a multiple of the 128-lane tile.
    N, C, H, W = 2, 4, 16, 16
    inputs = jax.random.normal(k_x, (N, C, H, W), dtype=jnp.float32)
    targets = jax.random.randint(k_t, (N, H, W), 0, C, dtype=jnp.int32)
    ignore_mask = jax.random.bernoulli(k_m, 0.1, (N, H, W))
    targets = jnp.where(ignore_mask, _IGNORE_INDEX, targets)

    loss = jax.block_until_ready(cross_entropy_loss_2d(inputs, targets))
    ref = jax.block_until_ready(_reference_loss(inputs, targets))
    assert jnp.allclose(loss, ref, rtol=1e-5, atol=1e-5), (loss, ref)

    # Case 2: ragged pixel tail (H*W not a multiple of 128) exercises the
    # in-kernel bounds mask (no wrapper-side padding of logits or targets).
    N2, C2, H2, W2 = 2, 5, 15, 17
    k_x2, k_t2, k_m2 = jax.random.split(jax.random.PRNGKey(1), 3)
    inputs2 = jax.random.normal(k_x2, (N2, C2, H2, W2), dtype=jnp.float32)
    targets2 = jax.random.randint(k_t2, (N2, H2, W2), 0, C2, dtype=jnp.int32)
    targets2 = jnp.where(jax.random.bernoulli(k_m2, 0.1, (N2, H2, W2)),
                         _IGNORE_INDEX, targets2)

    loss2 = jax.block_until_ready(cross_entropy_loss_2d(inputs2, targets2))
    ref2 = jax.block_until_ready(_reference_loss(inputs2, targets2))
    assert jnp.allclose(loss2, ref2, rtol=1e-5, atol=1e-5), (loss2, ref2)

    print("KERNEL_OK")
</pallas_src>

<mosaic_0001>
module attributes {stable_mosaic.version = 11 : i64} {
  func.func @_ce2d_kernel(%arg0: i32, %arg1: i32, %arg2: memref<1x4x256xf32, #tpu.memory_space<vmem>>, %arg3: memref<1x1x256xi32, #tpu.memory_space<vmem>>, %arg4: memref<1x1x1x1xf32, #tpu.memory_space<vmem>>, %arg5: memref<1x1x1x1xf32, #tpu.memory_space<vmem>>) attributes {dimension_semantics = [#tpu.dimension_semantics<parallel>, #tpu.dimension_semantics<parallel>], iteration_bounds = array<i64: 2, 1>, scalar_prefetch = 0 : i64, scratch_operands = 0 : i64, tpu.core_type = #tpu.core_type<tc>, window_params = [{transform_indices = @transform_0, window_bounds = array<i64: 1, 4, 256>}, {transform_indices = @transform_1, window_bounds = array<i64: 1, 1, 256>}, {transform_indices = @transform_2, window_bounds = array<i64: 1, 1, 1, 1>}, {transform_indices = @transform_3, window_bounds = array<i64: 1, 1, 1, 1>}]} {
    %c0 = arith.constant 0 : index
    %c0_0 = arith.constant 0 : index
    %c0_1 = arith.constant 0 : index
    %0 = vector.load %arg2[%c0, %c0_0, %c0_1] : memref<1x4x256xf32, #tpu.memory_space<vmem>>, vector<1x4x256xf32>
    %1 = vector.shape_cast %0 : vector<1x4x256xf32> to vector<4x256xf32>
    %c0_2 = arith.constant 0 : index
    %c0_3 = arith.constant 0 : index
    %c0_4 = arith.constant 0 : index
    %2 = vector.load %arg3[%c0_2, %c0_3, %c0_4] : memref<1x1x256xi32, #tpu.memory_space<vmem>>, vector<1x1x256xi32>
    %3 = vector.shape_cast %2 : vector<1x1x256xi32> to vector<1x256xi32>
    %c255_i32 = arith.constant 255 : i32
    %4 = vector.broadcast %c255_i32 : i32 to vector<1x256xi32>
    %5 = arith.cmpi ne, %3, %4 : vector<1x256xi32>
    %cst = arith.constant dense<0xFF800000> : vector<256xf32>
    %6 = vector.multi_reduction <maximumf>, %1, %cst [0] : vector<4x256xf32> to vector<256xf32>
    %7 = vector.shape_cast %6 : vector<256xf32> to vector<1x256xf32>
    %8 = vector.broadcast %7 : vector<1x256xf32> to vector<4x256xf32>
    %9 = arith.subf %1, %8 : vector<4x256xf32>
    %10 = math.exp %9 : vector<4x256xf32>
    %cst_5 = arith.constant dense<0.000000e+00> : vector<256xf32>
    %11 = vector.multi_reduction <add>, %10, %cst_5 [0] : vector<4x256xf32> to vector<256xf32>
    %12 = vector.shape_cast %11 : vector<256xf32> to vector<1x256xf32>
    %13 = math.log %12 : vector<1x256xf32>
    %14 = arith.addf %7, %13 : vector<1x256xf32>
    %15 = tpu.iota {dimensions = array<i32: 0>} : vector<4x256xi32>
    %16 = vector.broadcast %3 : vector<1x256xi32> to vector<4x256xi32>
    %17 = arith.cmpi eq, %15, %16 : vector<4x256xi32>
    %cst_6 = arith.constant 0.000000e+00 : f32
    %18 = vector.broadcast %cst_6 : f32 to vector<4x256xf32>
    %19 = arith.select %17, %1, %18 : vector<4x256xi1>, vector<4x256xf32>
    %cst_7 = arith.constant dense<0.000000e+00> : vector<256xf32>
    %20 = vector.multi_reduction <add>, %19, %cst_7 [0] : vector<4x256xf32> to vector<256xf32>
    %21 = vector.shape_cast %20 : vector<256xf32> to vector<1x256xf32>
    %22 = arith.subf %14, %21 : vector<1x256xf32>
    %cst_8 = arith.constant 0.000000e+00 : f32
    %23 = vector.broadcast %cst_8 : f32 to vector<1x256xf32>
    %24 = arith.select %5, %22, %23 : vector<1x256xi1>, vector<1x256xf32>
    %25 = vector.shape_cast %24 : vector<1x256xf32> to vector<1x1x256xf32>
    %cst_9 = arith.constant dense<0.000000e+00> : vector<1xf32>
    %26 = vector.multi_reduction <add>, %25, %cst_9 [1, 2] : vector<1x1x256xf32> to vector<1xf32>
    %27 = vector.shape_cast %26 : vector<1xf32> to vector<1x1x1xf32>
    %28 = vector.extract %27[0, 0, 0] : f32 from vector<1x1x1xf32>
    %29 = vector.broadcast %28 : f32 to vector<1x1x1x1xf32>
    %c0_10 = arith.constant 0 : index
    %c0_11 = arith.constant 0 : index
    %c0_12 = arith.constant 0 : index
    %c0_13 = arith.constant 0 : index
    %30 = vector.load %arg4[%c0_10, %c0_11, %c0_12, %c0_13] : memref<1x1x1x1xf32, #tpu.memory_space<vmem>>, vector<1x1x1x1xf32>
    tpu.vector_store %arg4[%c0_10, %c0_11, %c0_12, %c0_13], %29 {strides = array<i32>} : memref<1x1x1x1xf32, #tpu.memory_space<vmem>>, vector<1x1x1x1xf32>,
    %31 = arith.extui %5 : vector<1x256xi1> to vector<1x256xi32>
    %32 = arith.sitofp %31 : vector<1x256xi32> to vector<1x256xf32>
    %33 = vector.shape_cast %32 : vector<1x256xf32> to vector<1x1x256xf32>
    %cst_14 = arith.constant dense<0.000000e+00> : vector<1xf32>
    %34 = vector.multi_reduction <add>, %33, %cst_14 [1, 2] : vector<1x1x256xf32> to vector<1xf32>
    %35 = vector.shape_cast %34 : vector<1xf32> to vector<1x1x1xf32>
    %36 = vector.extract %35[0, 0, 0] : f32 from vector<1x1x1xf32>
    %37 = vector.broadcast %36 : f32 to vector<1x1x1x1xf32>
    %c0_15 = arith.constant 0 : index
    %c0_16 = arith.constant 0 : index
    %c0_17 = arith.constant 0 : index
    %c0_18 = arith.constant 0 : index
    %38 = vector.load %arg5[%c0_15, %c0_16, %c0_17, %c0_18] : memref<1x1x1x1xf32, #tpu.memory_space<vmem>>, vector<1x1x1x1xf32>
    tpu.vector_store %arg5[%c0_15, %c0_16, %c0_17, %c0_18], %37 {strides = array<i32>} : memref<1x1x1x1xf32, #tpu.memory_space<vmem>>, vector<1x1x1x1xf32>,
    return
  }
  func.func @transform_0(%arg0: i32, %arg1: i32) -> (i32, i32, i32) {
    %c0_i32 = arith.constant 0 : i32
    %c0_i32_0 = arith.constant 0 : i32
    return %arg0, %c0_i32, %arg1 : i32, i32, i32
  }
  func.func @transform_1(%arg0: i32, %arg1: i32) -> (i32, i32, i32) {
    %c0_i32 = arith.constant 0 : i32
    %c0_i32_0 = arith.constant 0 : i32
    return %arg0, %c0_i32, %arg1 : i32, i32, i32
  }
  func.func @transform_2(%arg0: i32, %arg1: i32) -> (i32, i32, i32, i32) {
    %c0_i32 = arith.constant 0 : i32
    %c0_i32_0 = arith.constant 0 : i32
    %c0_i32_1 = arith.constant 0 : i32
    return %arg0, %arg1, %c0_i32, %c0_i32_0 : i32, i32, i32, i32
  }
  func.func @transform_3(%arg0: i32, %arg1: i32) -> (i32, i32, i32, i32) {
    %c0_i32 = arith.constant 0 : i32
    %c0_i32_0 = arith.constant 0 : i32
    %c0_i32_1 = arith.constant 0 : i32
    return %arg0, %arg1, %c0_i32, %c0_i32_0 : i32, i32, i32, i32
  }
}

</mosaic_0001>

<llo_original>
// kernel: cross_entropy_loss_2d.1
$region0: #{cross_entropy_loss_2d.1}
  #allocation0 [shape = 'u32[]', space=smem, size = 0x4, offset = 0x4, fixed_abs, tag = 'smem constant byte address 0x4 - core index']
  #allocation1 [shape = 'u32[144,128]{1,0:T(1,128)}', space=vmem, size = 0x12000, scoped, tag = 'internal scratch']
  %s0 = inlined_call_operand.vmem [shape: f32[2,4,256], index: 0, kind: input, shape index: {}]
  %s1 = inlined_call_operand.vmem [shape: s32[2,1,256], index: 1, kind: input, shape index: {}]
  %s2 = inlined_call_operand.vmem [shape: f32[2,1,1,1], index: 2, kind: output, shape index: {0}]
  %s3 = inlined_call_operand.vmem [shape: f32[2,1,1,1], index: 3, kind: output, shape index: {1}]
  %4 = xla_tuple %s2, %s3
  %s5 = sld [smem:[#allocation0]]
  $region49: #{cross_entropy_loss_2d.1} parent=0
    _
  %s7 = ssub.s32 1, %s5
  %s8 = scalar_select 0, %s7, %s5
  loop: start=0, step=1, limit=4
  $region2: #{cross_entropy_loss_2d.1} parent=0 // loop_pre_header
    _
  $region3: #{cross_entropy_loss_2d.1} parent=0 // loop_header
    %s10 = sphi 0, %s14
    %p11 = scmp.ge.s32.totalorder %s10, 4
    %s17 = sphi 0, %s29
    %s18 = sphi 0, %s25
    %s19 = sphi 0, %s17
    %s20 = sphi 0, %s18
    %s21 = sphi 0, %s19
    %s22 = sphi 0, %s20
    %s34 = sphi 0, %s36
    %s37 = sphi 0, %s34
    %s38 = sphi 0, %s37
    %s54 = sphi 0, %s38
    %s62 = sphi 0, %s64
    %s65 = sphi 0, %s62
    %s66 = sphi 0, %s65
    %s82 = sphi 0, %s66
    %s90 = sphi 0, %s92
    %s93 = sphi 0, %s90
    %s94 = sphi 0, %s93
    %s110 = sphi 0, %s94
    %s118 = sphi 0, %s120
    %s121 = sphi 0, %s118
    %s122 = sphi 0, %s121
    %s138 = sphi 0, %s122
  $region4: #{cross_entropy_loss_2d.1} parent=0 // loop_header_branch
    %13 = sbr.rel (%p11) target = $region8
  $region5: #{cross_entropy_loss_2d.1} parent=0 // loop_body
    %s15 = ssub.s32 %s10, 1
    %s16 = ssub.s32 %s10, 2
    %s23 = sadd.s32 1, %s18
    %p24 = scmp.ge.s32.totalorder %s23, 1
    %s25 = scalar_select %p24, 0, %s23
    %s26 = sadd.s32 1, %s17
    %s27 = scalar_select %p24, %s26, %s17
    %p28 = scmp.ge.s32.totalorder %s27, 2
    %s29 = scalar_select %p28, 0, %s27
    %s30 = ssub.s32 %s17, %s29
    %s31 = ssub.s32 %s18, %s25
    %s32 = sor.u32 %s30, %s31
    %p33 = scmp.eq.s32.totalorder %s32, 0
    %s35 = sadd.s32 %s34, 1
    %s36 = scalar_select %p33, %s34, %s35
    %p39 = pneg %p33
    %p40 = scmp.eq.s32.totalorder %s10, 1
    %p41 = por %p39, %p40
    %p42 = scmp.ne.s32.totalorder %s34, %s37
    %p43 = scmp.eq.s32.totalorder %s10, 0
    %p44 = por %p42, %p43
    %p45 = scmp.ne.s32.totalorder %s34, %s37
    %p46 = scmp.eq.s32.totalorder %s15, 1
    %p47 = por %p45, %p46
    %p48 = scmp.ne.s32.totalorder %s37, %s38
    %p49 = scmp.eq.s32.totalorder %s15, 0
    %p50 = por %p48, %p49
    %p51 = scmp.ne.s32.totalorder %s37, %s38
    %p52 = scmp.eq.s32.totalorder %s16, 1
    %p53 = por %p51, %p52
    %p55 = scmp.ne.s32.totalorder %s38, %s54
    %p56 = scmp.eq.s32.totalorder %s16, 0
    %p57 = por %p55, %p56
    %s58 = ssub.s32 %s17, %s29
    %s59 = ssub.s32 %s18, %s25
    %s60 = sor.u32 %s58, %s59
    %p61 = scmp.eq.s32.totalorder %s60, 0
    %s63 = sadd.s32 %s62, 1
    %s64 = scalar_select %p61, %s62, %s63
    %p67 = pneg %p61
    %p68 = scmp.eq.s32.totalorder %s10, 1
    %p69 = por %p67, %p68
    %p70 = scmp.ne.s32.totalorder %s62, %s65
    %p71 = scmp.eq.s32.totalorder %s10, 0
    %p72 = por %p70, %p71
    %p73 = scmp.ne.s32.totalorder %s62, %s65
    %p74 = scmp.eq.s32.totalorder %s15, 1
    %p75 = por %p73, %p74
    %p76 = scmp.ne.s32.totalorder %s65, %s66
    %p77 = scmp.eq.s32.totalorder %s15, 0
    %p78 = por %p76, %p77
    %p79 = scmp.ne.s32.totalorder %s65, %s66
    %p80 = scmp.eq.s32.totalorder %s16, 1
    %p81 = por %p79, %p80
    %p83 = scmp.ne.s32.totalorder %s66, %s82
    %p84 = scmp.eq.s32.totalorder %s16, 0
    %p85 = por %p83, %p84
    %s86 = ssub.s32 %s17, %s29
    %s87 = ssub.s32 %s18, %s25
    %s88 = sor.u32 %s86, %s87
    %p89 = scmp.eq.s32.totalorder %s88, 0
    %s91 = sadd.s32 %s90, 1
    %s92 = scalar_select %p89, %s90, %s91
    %p95 = pneg %p89
    %p96 = scmp.eq.s32.totalorder %s10, 1
    %p97 = por %p95, %p96
    %p98 = scmp.ne.s32.totalorder %s90, %s93
    %p99 = scmp.eq.s32.totalorder %s10, 0
    %p100 = por %p98, %p99
    %p101 = scmp.ne.s32.totalorder %s90, %s93
    %p102 = scmp.eq.s32.totalorder %s15, 1
    %p103 = por %p101, %p102
    %p104 = scmp.ne.s32.totalorder %s93, %s94
    %p105 = scmp.eq.s32.totalorder %s15, 0
    %p106 = por %p104, %p105
    %p107 = scmp.ne.s32.totalorder %s93, %s94
    %p108 = scmp.eq.s32.totalorder %s16, 1
    %p109 = por %p107, %p108
    %p111 = scmp.ne.s32.totalorder %s94, %s110
    %p112 = scmp.eq.s32.totalorder %s16, 0
    %p113 = por %p111, %p112
    %s114 = ssub.s32 %s17, %s29
    %s115 = ssub.s32 %s18, %s25
    %s116 = sor.u32 %s114, %s115
    %p117 = scmp.eq.s32.totalorder %s116, 0
    %s119 = sadd.s32 %s118, 1
    %s120 = scalar_select %p117, %s118, %s119
    %p123 = pneg %p117
    %p124 = scmp.eq.s32.totalorder %s10, 1
    %p125 = por %p123, %p124
    %p126 = scmp.ne.s32.totalorder %s118, %s121
    %p127 = scmp.eq.s32.totalorder %s10, 0
    %p128 = por %p126, %p127
    %p129 = scmp.ne.s32.totalorder %s118, %s121
    %p130 = scmp.eq.s32.totalorder %s15, 1
    %p131 = por %p129, %p130
    %p132 = scmp.ne.s32.totalorder %s121, %s122
    %p133 = scmp.eq.s32.totalorder %s15, 0
    %p134 = por %p132, %p133
    %p135 = scmp.ne.s32.totalorder %s121, %s122
    %p136 = scmp.eq.s32.totalorder %s16, 1
    %p137 = por %p135, %p136
    %p139 = scmp.ne.s32.totalorder %s122, %s138
    %p140 = scmp.eq.s32.totalorder %s16, 0
    %p141 = por %p139, %p140
    %p142 = scmp.le.s32.totalorder 1, %s10
    %p143 = scmp.lt.s32.totalorder %s10, 3
    %p144 = pnand %p142, %p143
    %p145 = pneg %p144
    // Predicated region
    $region9: #{cross_entropy_loss_2d.1} parent=5 // pred_check
      _
    $region10: #{cross_entropy_loss_2d.1} parent=5 // pred_check_branch
      %147 = sbr.rel (%p144) target = $region12
    $region11: #{cross_entropy_loss_2d.1} parent=5 // pred_region
      %s148 = ssub.s32 %s10, 1
    $region12: #{cross_entropy_loss_2d.1} parent=5 // pred_fallthru
      _
    %p149 = scmp.lt.s32.totalorder %s10, 2
    // Predicated region
    $region13: #{cross_entropy_loss_2d.1} parent=5 // pred_check
      %p150 = pneg %p149
    $region14: #{cross_entropy_loss_2d.1} parent=5 // pred_check_branch
      %152 = sbr.rel (%p150) target = $region16
    $region15: #{cross_entropy_loss_2d.1} parent=5 // pred_region
      // Predicated region
      $region17: #{cross_entropy_loss_2d.1} parent=15 // pred_check
        %p153 = pneg %p44
      $region18: #{cross_entropy_loss_2d.1} parent=15 // pred_check_branch
        %155 = sbr.rel (%p153) target = $region20
      $region19: #{cross_entropy_loss_2d.1} parent=15 // pred_region
        %s156 = smul.u32 2, %s18
        %p157 = scmp.lt.s32.totalorder %s17, 1
        %s158 = scalar_select %p157, %s17, 1
        %p159 = scmp.lt.s32.totalorder %s156, 1
        %s160 = scalar_select %p159, %s156, 1
        %s161 = smul.addr %s158, 2
        %s162 = sadd.s32 %s160, %s161
        %s163 = smul.addr %s162, 4
        %s164 = scalar_lea.vmem %s0, %s163
        %s165 = smul.u32 2, %s18
      $region20: #{cross_entropy_loss_2d.1} parent=15 // pred_fallthru
        _
      // Predicated region
      $region21: #{cross_entropy_loss_2d.1} parent=15 // pred_check
        %p166 = pneg %p72
      $region22: #{cross_entropy_loss_2d.1} parent=15 // pred_check_branch
        %168 = sbr.rel (%p166) target = $region24
      $region23: #{cross_entropy_loss_2d.1} parent=15 // pred_region
        %s169 = smul.u32 2, %s18
        %p170 = scmp.lt.s32.totalorder %s17, 1
        %s171 = scalar_select %p170, %s17, 1
        %p172 = scmp.lt.s32.totalorder %s169, 1
        %s173 = scalar_select %p172, %s169, 1
        %s174 = smul.addr %s171, 2
        %s175 = sadd.s32 %s173, %s174
        %s176 = scalar_lea.vmem %s1, %s175
        %s177 = smul.u32 2, %s18
      $region24: #{cross_entropy_loss_2d.1} parent=15 // pred_fallthru
        _
    $region16: #{cross_entropy_loss_2d.1} parent=5 // pred_fallthru
      _
    %p178 = scmp.le.s32.totalorder 1, %s10
    %p179 = scmp.lt.s32.totalorder %s10, 3
    %p180 = pnand %p178, %p179
    %p181 = pneg %p180
    // Predicated region
    $region25: #{cross_entropy_loss_2d.1} parent=5 // pred_check
      _
    $region26: #{cross_entropy_loss_2d.1} parent=5 // pred_check_branch
      %183 = sbr.rel (%p180) target = $region28
    $region27: #{cross_entropy_loss_2d.1} parent=5 // pred_region
      %s184 = ssub.s32 %s10, 1
      %s185 = smul.u32 2, %s20
      %p186 = scmp.lt.s32.totalorder %s19, 1
      %s187 = scalar_select %p186, %s19, 1
      %p188 = scmp.lt.s32.totalorder %s185, 1
      %s189 = scalar_select %p188, %s185, 1
      %s190 = smul.addr %s187, 2
      %s191 = sadd.s32 %s189, %s190
      %s192 = smul.addr %s191, 4
      %s193 = scalar_lea.vmem %s0, %s192
      %p194 = pneg %p50
      %p195 = pneg %p47
      %s196 = smul.u32 2, %s20
      %p197 = scmp.lt.s32.totalorder %s19, 1
      %s198 = scalar_select %p197, %s19, 1
      %p199 = scmp.lt.s32.totalorder %s196, 1
      %s200 = scalar_select %p199, %s196, 1
      %s201 = smul.addr %s198, 2
      %s202 = sadd.s32 %s200, %s201
      %s203 = scalar_lea.vmem %s1, %s202
      %p204 = pneg %p78
      %p205 = pneg %p75
      %p206 = pneg %p106
      %p207 = pneg %p103
      %p208 = scmp.lt.s32.totalorder %s19, 1
      %s209 = scalar_select %p208, %s19, 1
      %p210 = scmp.lt.s32.totalorder %s20, 0
      %s211 = scalar_select %p210, %s20, 0
      %s212 = sadd.s32 %s211, %s209
      %s213 = scalar_lea.vmem %s2, %s212
      %p214 = pneg %p134
      %p215 = pneg %p131
      %p216 = scmp.lt.s32.totalorder %s19, 1
      %s217 = scalar_select %p216, %s19, 1
      %p218 = scmp.lt.s32.totalorder %s20, 0
      %s219 = scalar_select %p218, %s20, 0
      %s220 = sadd.s32 %s219, %s217
      %s221 = scalar_lea.vmem %s3, %s220
      %s222 = smul.u32 2, %s20
      %p223 = scmp.lt.s32.totalorder %s19, 1
      %s224 = scalar_select %p223, %s19, 1
      %p225 = scmp.lt.s32.totalorder %s222, 1
      %s226 = scalar_select %p225, %s222, 1
      %s227 = smul.addr %s224, 2
      %s228 = sadd.s32 %s226, %s227
      %s229 = smul.addr %s228, 4
      %s230 = scalar_lea.vmem %s0, %s229
      %s231 = smul.u32 2, %s20
      %s232 = smul.u32 2, %s20
      %p233 = scmp.lt.s32.totalorder %s19, 1
      %s234 = scalar_select %p233, %s19, 1
      %p235 = scmp.lt.s32.totalorder %s232, 1
      %s236 = scalar_select %p235, %s232, 1
      %s237 = smul.addr %s234, 2
      %s238 = sadd.s32 %s236, %s237
      %s239 = scalar_lea.vmem %s1, %s238
      %s240 = smul.u32 2, %s20
      %p241 = scmp.lt.s32.totalorder %s19, 1
      %s242 = scalar_select %p241, %s19, 1
      %p243 = scmp.lt.s32.totalorder %s20, 0
      %s244 = scalar_select %p243, %s20, 0
      %s245 = sadd.s32 %s244, %s242
      %s246 = scalar_lea.vmem %s2, %s245
      %p247 = scmp.lt.s32.totalorder %s19, 1
      %s248 = scalar_select %p247, %s19, 1
      %p249 = scmp.lt.s32.totalorder %s20, 0
      %s250 = scalar_select %p249, %s20, 0
      %s251 = sadd.s32 %s250, %s248
      %s252 = scalar_lea.vmem %s3, %s251
      %v253 = vld [vmem:[%s230] sm:$0xff]
      %v254 = vld [vmem:[%s239] sm:$0x3]
      %vm255 = vcmp.ne.s32.totalorder %v254, 255
      %v257 = vcombine.high %v253, %v253
      %vm259 = vcmask 1043456
      %v260 = vsel %vm259, %v253, -inf
      %v261 = vrot.slane %v260, 4
      %v262 = vmax.f32 %v260, %v261
      %v263 = vrot.slane %v262, 2
      %v264 = vmax.f32 %v262, %v263
      %v265 = vrot.slane %v264, 1
      %v266 = vmax.f32 %v264, %v265
      %v267 = vsel %vm259, %v257, -inf
      %v268 = vrot.slane %v267, 4
      %v269 = vmax.f32 %v267, %v268
      %v270 = vrot.slane %v269, 2
      %v271 = vmax.f32 %v269, %v270
      %v272 = vrot.slane %v271, 1
      %v273 = vmax.f32 %v271, %v272
      %v276 = vcombine.low %v266, %v273
      %v278 = vsub.f32 %v253, %v276
      %v279 = vmul.f32 %v278, 1.442695
      %v280 = vpow.pop %v279
      %v282 = vcombine.high %v280, %v280
      %v284 = vsel %vm259, %v280, 0.0
      %v285 = vrot.slane %v284, 4
      %v286 = vadd.f32 %v284, %v285
      %v287 = vrot.slane %v286, 2
      %v288 = vadd.f32 %v286, %v287
      %v289 = vrot.slane %v288, 1
      %v290 = vadd.f32 %v288, %v289
      %v291 = vsel %vm259, %v282, 0.0
      %v292 = vrot.slane %v291, 4
      %v293 = vadd.f32 %v291, %v292
      %v294 = vrot.slane %v293, 2
      %v295 = vadd.f32 %v293, %v294
      %v296 = vrot.slane %v295, 1
      %v297 = vadd.f32 %v295, %v296
      %v298 = vlog2.pop %v290
      %v299 = vmul.f32 %v298, 0.6931472
      %v300 = vlog2.pop %v297
      %v301 = vmul.f32 %v300, 0.6931472
      %v302 = vadd.f32 %v266, %v299
      %v303 = vadd.f32 %v273, %v301
      %v304 = vlaneseq
      %v305 = vshrl.u32 %v304, 7
      %v306 = vlaneseq
      %v307 = vshrl.u32 %v306, 7
      %v308 = vsub.s32 0, %v307
      %v309 = vrot.slane %v254, %v308
      %v310 = vlaneseq
      %v311 = vshrl.u32 %v310, 7
      %v312 = vsub.s32 1, %v311
      %v313 = vrot.slane %v254, %v312
      %vm314 = vcmp.eq.s32.totalorder %v305, %v309
      %vm315 = vcmp.eq.s32.totalorder %v305, %v313
      %v316 = vsel %vm314, %v253, 0.0
      %v317 = vsel %vm315, %v257, 0.0
      %v318 = vsel %vm259, %v316, 0.0
      %v319 = vrot.slane %v318, 4
      %v320 = vadd.f32 %v318, %v319
      %v321 = vrot.slane %v320, 2
      %v322 = vadd.f32 %v320, %v321
      %v323 = vrot.slane %v322, 1
      %v324 = vadd.f32 %v322, %v323
      %v325 = vsel %vm259, %v317, 0.0
      %v326 = vrot.slane %v325, 4
      %v327 = vadd.f32 %v325, %v326
      %v328 = vrot.slane %v327, 2
      %v329 = vadd.f32 %v327, %v328
      %v330 = vrot.slane %v329, 1
      %v331 = vadd.f32 %v329, %v330
      %v332 = vsub.f32 %v302, %v324
      %v333 = vsub.f32 %v303, %v331
      %v336 = vcombine.low %v332, %v333
      %v338 = vunpack.c.l.s4 1966171168
      %v339 = vunpack.c.0.s8 %v338
      %v340 = vlaneseq
      %v341 = vshrl.u32 %v340, 7
      %v342 = vsub.s32 %v339, %v341
      %v343 = vrot.slane %v336, %v342
      %v345 = vunpack.c.l.s4 1966171168
      %v346 = vunpack.c.0.s8 %v345
      %v347 = vlaneseq
      %v348 = vshrl.u32 %v347, 7
      %v349 = vsub.s32 %v346, %v348
      %v350 = vrot.slane %v343, %v349
      %v352 = vsel %vm255, %v350, 0.0
      %v354 = vlaneseq
      %v355 = vshrl.u32 %v354, 7
      %v356 = vsub.s32 0, %v355
      %v357 = vrot.slane %v352, %v356
      %v358 = vlaneseq
      %v359 = vshrl.u32 %v358, 7
      %v360 = vsub.s32 1, %v359
      %v361 = vrot.slane %v352, %v360
      %vm364 = vcmask 1040384
      %v365 = vsel %vm364, %v357, 0.0
      %v366 = vsel %vm364, %v361, 0.0
      %v367 = vadd.f32 %v365, %v366
      %368 = vadd.xlane.f32.xlu0 %v367
      %v369 = vpop.xlane.xlu0 %368
      %v370 = vrot.slane %v369, 4
      %v371 = vadd.f32 %v369, %v370
      %v372 = vrot.slane %v371, 2
      %v373 = vadd.f32 %v371, %v372
      %v374 = vrot.slane %v373, 1
      %v375 = vadd.f32 %v373, %v374
      %s376 = vtos %v375
      %v377 = vstv %s376
      %vm378 = vcmask 0
      %379 = vst.msk [vmem:[%s246] sm:$0x1] %vm378, %v377
      %v380 = vsel %vm255, 1, 0
      %v381 = vcvt.s32.f32 %v380
      %v383 = vlaneseq
      %v384 = vshrl.u32 %v383, 7
      %v385 = vsub.s32 0, %v384
      %v386 = vrot.slane %v381, %v385
      %v387 = vlaneseq
      %v388 = vshrl.u32 %v387, 7
      %v389 = vsub.s32 1, %v388
      %v390 = vrot.slane %v381, %v389
      %v393 = vsel %vm364, %v386, 0.0
      %v394 = vsel %vm364, %v390, 0.0
      %v395 = vadd.f32 %v393, %v394
      %396 = vadd.xlane.f32.xlu0 %v395
      %v397 = vpop.xlane.xlu0 %396
      %v398 = vrot.slane %v397, 4
      %v399 = vadd.f32 %v397, %v398
      %v400 = vrot.slane %v399, 2
      %v401 = vadd.f32 %v399, %v400
      %v402 = vrot.slane %v401, 1
      %v403 = vadd.f32 %v401, %v402
      %s404 = vtos %v403
      %v405 = vstv %s404
      %406 = vst.msk [vmem:[%s252] sm:$0x1] %vm378, %v405
      %p407 = scmp.lt.s32.totalorder %s19, 1
      %s408 = scalar_select %p407, %s19, 1
      %p409 = scmp.lt.s32.totalorder %s20, 0
      %s410 = scalar_select %p409, %s20, 0
      %s411 = sadd.s32 %s410, %s408
      %s412 = scalar_lea.vmem %s2, %s411
      %p413 = scmp.lt.s32.totalorder %s19, 1
      %s414 = scalar_select %p413, %s19, 1
      %p415 = scmp.lt.s32.totalorder %s20, 0
      %s416 = scalar_select %p415, %s20, 0
      %s417 = sadd.s32 %s416, %s414
      %s418 = scalar_lea.vmem %s3, %s417
      // Predicated region
      $region29: #{cross_entropy_loss_2d.1} parent=27 // pred_check
        %p419 = pneg %p103
      $region30: #{cross_entropy_loss_2d.1} parent=27 // pred_check_branch
        %421 = sbr.rel (%p419) target = $region32
      $region31: #{cross_entropy_loss_2d.1} parent=27 // pred_region
        _
      $region32: #{cross_entropy_loss_2d.1} parent=27 // pred_fallthru
        _
      // Predicated region
      $region33: #{cross_entropy_loss_2d.1} parent=27 // pred_check
        %p422 = pneg %p131
      $region34: #{cross_entropy_loss_2d.1} parent=27 // pred_check_branch
        %424 = sbr.rel (%p422) target = $region36
      $region35: #{cross_entropy_loss_2d.1} parent=27 // pred_region
        _
      $region36: #{cross_entropy_loss_2d.1} parent=27 // pred_fallthru
        _
    $region28: #{cross_entropy_loss_2d.1} parent=5 // pred_fallthru
      _
    %p425 = scmp.le.s32.totalorder 2, %s10
    // Predicated region
    $region37: #{cross_entropy_loss_2d.1} parent=5 // pred_check
      %p426 = pneg %p425
    $region38: #{cross_entropy_loss_2d.1} parent=5 // pred_check_branch
      %428 = sbr.rel (%p426) target = $region40
    $region39: #{cross_entropy_loss_2d.1} parent=5 // pred_region
      %s429 = ssub.s32 %s10, 2
      // Predicated region
      $region41: #{cross_entropy_loss_2d.1} parent=39 // pred_check
        %p430 = pneg %p109
      $region42: #{cross_entropy_loss_2d.1} parent=39 // pred_check_branch
        %432 = sbr.rel (%p430) target = $region44
      $region43: #{cross_entropy_loss_2d.1} parent=39 // pred_region
        %p433 = scmp.lt.s32.totalorder %s21, 1
        %s434 = scalar_select %p433, %s21, 1
        %p435 = scmp.lt.s32.totalorder %s22, 0
        %s436 = scalar_select %p435, %s22, 0
        %s437 = sadd.s32 %s436, %s434
        %s438 = scalar_lea.vmem %s2, %s437
      $region44: #{cross_entropy_loss_2d.1} parent=39 // pred_fallthru
        _
      // Predicated region
      $region45: #{cross_entropy_loss_2d.1} parent=39 // pred_check
        %p439 = pneg %p137
      $region46: #{cross_entropy_loss_2d.1} parent=39 // pred_check_branch
        %441 = sbr.rel (%p439) target = $region48
      $region47: #{cross_entropy_loss_2d.1} parent=39 // pred_region
        %p442 = scmp.lt.s32.totalorder %s21, 1
        %s443 = scalar_select %p442, %s21, 1
        %p444 = scmp.lt.s32.totalorder %s22, 0
        %s445 = scalar_select %p444, %s22, 0
        %s446 = sadd.s32 %s445, %s443
        %s447 = scalar_lea.vmem %s3, %s446
      $region48: #{cross_entropy_loss_2d.1} parent=39 // pred_fallthru
        _
    $region40: #{cross_entropy_loss_2d.1} parent=5 // pred_fallthru
      _
  $region6: #{cross_entropy_loss_2d.1} parent=0 // loop_footer
    %s14 = sadd.s32 1, %s10
  $region7: #{cross_entropy_loss_2d.1} parent=0 // loop_footer_branch
    %9 = sbr.rel target = $region3
  $region8: #{cross_entropy_loss_2d.1} parent=0 // loop_exit
    _

</llo_original>
